<compile_context>
chip_gen: v5e
topology: v5e:2x2
jax: 0.10.0
libtpu: 0.0.40
codegen_flags: <defaults>
</compile_context>

<pallas_src>
import jax
import jax.numpy as jnp
from jax.experimental import pallas as pl
from jax.experimental.pallas import tpu as pltpu

FEAT = 128      # lane width: hidden dim zero-padded to one full vreg lane row
_ALIGN = 16     # bf16 sublane packing -> keep weight-slab regions 16-row aligned


def _round_up(n, m):
    return ((n + m - 1) // m) * m


def _elu(x):
    # ELU(alpha=1).  exp(x)-1 is a single EUP push per element.  jnp.where
    # evaluates both branches: exp overflows to +inf for large positive x but
    # that branch is discarded (no NaN hazard).  Padding correctness relies on
    # ELU(0) == 0 so zero-padded lanes stay exactly zero through fc2/fc3.
    return jnp.where(x > 0.0, x, jnp.exp(x) - 1.0)


def _slab_layout(latent_pad, feat):
    """Row offsets inside the packed bf16 parameter slab (16-row aligned)."""
    w1_row = 0
    w2_row = _round_up(latent_pad, _ALIGN)
    w3_row = w2_row + feat
    b_row = w3_row + feat                  # rows b_row+0/1/2 hold b1/b2/b3
    n_rows = b_row + _ALIGN
    return w1_row, w2_row, w3_row, b_row, n_rows


def pack_params(w1, b1, w2, b2, w3, b3, feat=FEAT):
    """Pack the six nn.Linear tensors into one zero-padded (rows, feat) bf16 slab.

    Weights are stored as (in_features, out_features) (transpose of PyTorch's
    layout) so the kernel computes y = x @ W + b directly.  Zero padding makes
    the padded hidden lanes mathematically inert (relies on ELU(0) = 0 and on
    padded bias lanes being exactly zero).
    """
    latent_dim, nhidden = w1.shape
    assert w2.shape == (nhidden, nhidden) and w3.shape == (nhidden, latent_dim)
    assert b1.shape == (nhidden,) and b2.shape == (nhidden,) and b3.shape == (latent_dim,)
    assert max(latent_dim, nhidden) <= feat
    latent_pad = _round_up(latent_dim, 8)
    w1_row, w2_row, w3_row, b_row, n_rows = _slab_layout(latent_pad, feat)
    slab = jnp.zeros((n_rows, feat), jnp.float32)
    slab = slab.at[w1_row:w1_row + latent_dim, :nhidden].set(w1)
    slab = slab.at[w2_row:w2_row + nhidden, :nhidden].set(w2)
    slab = slab.at[w3_row:w3_row + nhidden, :latent_dim].set(w3)
    slab = slab.at[b_row + 0, :nhidden].set(b1)
    slab = slab.at[b_row + 1, :nhidden].set(b2)
    slab = slab.at[b_row + 2, :latent_dim].set(b3)
    # bf16 operands hit the native MXU path; accumulation stays f32 in-kernel.
    return slab.astype(jnp.bfloat16)


def _latent_odefunc_kernel(x_ref, w_ref, o_ref):
    latent_pad = x_ref.shape[1]   # sublane-aligned input width (>= latent_dim)
    latent_dim = o_ref.shape[1]   # true latent dim
    feat = w_ref.shape[1]
    w1_row, w2_row, w3_row, b_row, _ = _slab_layout(latent_pad, feat)

    f32, bf16 = jnp.float32, jnp.bfloat16

    x = x_ref[...].astype(bf16)                          # (TB, latent_pad)
    b1 = w_ref[b_row + 0:b_row + 1, :].astype(f32)       # (1, feat)
    b2 = w_ref[b_row + 1:b_row + 2, :].astype(f32)
    b3 = w_ref[b_row + 2:b_row + 3, :].astype(f32)

    # fc1 + ELU : (TB, latent_pad) @ (latent_pad, feat), bf16 MXU, f32 acc.
    h = jnp.dot(x, w_ref[w1_row:w1_row + latent_pad, :],
                preferred_element_type=f32) + b1
    h = _elu(h)
    # fc2 + ELU : (TB, feat) @ (feat, feat); padded rows/cols are zero.
    h = jnp.dot(h.astype(bf16), w_ref[w2_row:w2_row + feat, :],
                preferred_element_type=f32) + b2
    h = _elu(h)
    # fc3 (no activation).  Only the first latent_dim lanes are meaningful;
    # storing (TB, latent_dim) keeps HBM writeback at the real output size
    # instead of a 32x lane-padded slab plus a wrapper slice copy.
    y = jnp.dot(h.astype(bf16), w_ref[w3_row:w3_row + feat, :],
                preferred_element_type=f32) + b3
    o_ref[...] = y[:, :latent_dim]


def latent_odefunc(t, x, param_slab, *, block_b=1024):
    """Batched LatentODEfunc forward.  `t` is ignored (parity with forward(t, x)).

    TODO(synk): self.nfe (Python-side call counter) has no Pallas equivalent;
    track it in the caller if needed.
    TODO(synk): for the full latent-ODE workload, fuse the integrator
    (Euler/RK stages) into one pallas_call so the state tile and weight slab
    stay VMEM-resident across time steps; this kernel is the per-RHS-evaluation
    building block (re-derive VMEM vs v7x's 64 MiB when doing so).
    """
    del t  # unused by the module's forward
    B, latent_dim = x.shape
    n_rows, feat = param_slab.shape
    latent_pad = _round_up(latent_dim, 8)

    # Sublane-align the fc1 contraction (zero lanes are mathematically inert).
    if latent_pad != latent_dim:
        x = jnp.pad(x, ((0, 0), (0, latent_pad - latent_dim)))

    # Batch tile: as large as block_b allows (per-grid-step overhead dominates
    # otherwise), but keep >=2 grid steps so the "parallel" axis can shard
    # across v7x's 2 TensorCores (negligible extra cost on 1-TC v5e/v6e).
    bp_min = _round_up(B, 8)
    tb = _round_up(min(block_b, bp_min), 8)
    if bp_min > 8:
        tb = min(tb, _round_up(pl.cdiv(bp_min, 2), 8))
    bp = _round_up(B, tb)
    if bp != B:
        x = jnp.pad(x, ((0, bp - B), (0, 0)))

    # Advisory cost hint so XLA schedules neighboring ops around this small call.
    cost = pl.CostEstimate(
        flops=2 * bp * feat * (latent_pad + 2 * feat),
        transcendentals=2 * bp * feat,                       # two ELU exp's
        bytes_accessed=(bp * latent_pad + bp * latent_dim) * 4 + n_rows * feat * 2,
    )

    out = pl.pallas_call(
        _latent_odefunc_kernel,
        out_shape=jax.ShapeDtypeStruct((bp, latent_dim), jnp.float32),
        grid=(bp // tb,),
        in_specs=[
            pl.BlockSpec((tb, latent_pad), lambda i: (i, 0)),   # batch tile
            pl.BlockSpec((n_rows, feat), lambda i: (0, 0)),     # VMEM-resident params
        ],
        out_specs=pl.BlockSpec((tb, latent_dim), lambda i: (i, 0)),
        compiler_params=pltpu.CompilerParams(
            dimension_semantics=("parallel",),   # shard batch across v7x's 2 TCs
        ),
        cost_estimate=cost,
    )(x, param_slab)
    return out[:B] if bp != B else out


def init_raw_params(key, latent_dim=4, nhidden=20):
    """Synthetic params mirroring nn.Linear's U(-1/sqrt(fan_in), +) init,
    stored pre-transposed as (in_features, out_features)."""
    k = jax.random.split(key, 6)
    s1 = 1.0 / jnp.sqrt(jnp.float32(latent_dim))
    s2 = 1.0 / jnp.sqrt(jnp.float32(nhidden))
    return dict(
        w1=jax.random.uniform(k[0], (latent_dim, nhidden), jnp.float32, -s1, s1),
        b1=jax.random.uniform(k[1], (nhidden,), jnp.float32, -s1, s1),
        w2=jax.random.uniform(k[2], (nhidden, nhidden), jnp.float32, -s2, s2),
        b2=jax.random.uniform(k[3], (nhidden,), jnp.float32, -s2, s2),
        w3=jax.random.uniform(k[4], (nhidden, latent_dim), jnp.float32, -s2, s2),
        b3=jax.random.uniform(k[5], (latent_dim,), jnp.float32, -s2, s2),
    )


def reference_forward_f32(x, p):
    h = _elu(x @ p["w1"] + p["b1"])
    h = _elu(h @ p["w2"] + p["b2"])
    return h @ p["w3"] + p["b3"]


def reference_forward_bf16(x, p):
    """Emulates the kernel's numerics (bf16 MXU operands, f32 accumulation,
    bf16-stored weights/biases) so the kernel can be checked tightly."""
    bf16, f32 = jnp.bfloat16, jnp.float32

    def mm(a, w):
        return jnp.dot(a.astype(bf16), w.astype(bf16), preferred_element_type=f32)

    def b(v):
        return v.astype(bf16).astype(f32)

    h = _elu(mm(x, p["w1"]) + b(p["b1"]))
    h = _elu(mm(h, p["w2"]) + b(p["b2"]))
    return mm(h, p["w3"]) + b(p["b3"])


if __name__ == "__main__":
    latent_dim, nhidden, batch = 4, 20, 256   # 256 rows -> two 128-row grid steps
    key = jax.random.PRNGKey(0)
    kp, kx = jax.random.split(key)

    raw = init_raw_params(kp, latent_dim=latent_dim, nhidden=nhidden)
    param_slab = pack_params(**raw)
    x = jax.random.normal(kx, (batch, latent_dim), dtype=jnp.float32)
    t = jnp.float32(0.0)  # unused by the module's forward, kept for parity

    fwd = jax.jit(latent_odefunc)
    out = jax.block_until_ready(fwd(t, x, param_slab))
    assert out.shape == (batch, latent_dim)

    # Tight check against a reference using the kernel's exact numerics
    # (bf16 operands, f32 accumulation): remaining diff is accumulation order.
    ref16 = reference_forward_bf16(x, raw)
    err16 = float(jnp.max(jnp.abs(out - ref16)))
    assert jnp.allclose(out, ref16, atol=1e-4, rtol=1e-4), err16

    # Loose sanity check against the original all-f32 math: residual error is
    # the bf16 operand rounding, well inside the model's useful precision.
    ref32 = reference_forward_f32(x, raw)
    err32 = float(jnp.max(jnp.abs(out - ref32)))
    assert jnp.allclose(out, ref32, atol=5e-2, rtol=5e-2), err32

    print("KERNEL_OK")
</pallas_src>

<mosaic_0001>
module attributes {stable_mosaic.version = 11 : i64} {
  func.func @_latent_odefunc_kernel(%arg0: i32, %arg1: memref<128x8xf32, #tpu.memory_space<vmem>>, %arg2: memref<288x128xbf16, #tpu.memory_space<vmem>>, %arg3: memref<128x4xf32, #tpu.memory_space<vmem>>) attributes {dimension_semantics = [#tpu.dimension_semantics<parallel>], iteration_bounds = array<i64: 2>, scalar_prefetch = 0 : i64, scratch_operands = 0 : i64, tpu.core_type = #tpu.core_type<tc>, window_params = [{transform_indices = @transform_0, window_bounds = array<i64: 128, 8>}, {pipeline_mode = #tpu.pipeline_mode<synchronous>, transform_indices = @transform_1, window_bounds = array<i64: 288, 128>}, {transform_indices = @transform_2, window_bounds = array<i64: 128, 4>}]} {
    %c0 = arith.constant 0 : index
    %c0_0 = arith.constant 0 : index
    %0 = vector.load %arg1[%c0, %c0_0] : memref<128x8xf32, #tpu.memory_space<vmem>>, vector<128x8xf32>
    %1 = arith.truncf %0 : vector<128x8xf32> to vector<128x8xbf16>
    %c272 = arith.constant 272 : index
    %c0_1 = arith.constant 0 : index
    %2 = vector.load %arg2[%c272, %c0_1] : memref<288x128xbf16, #tpu.memory_space<vmem>>, vector<1x128xbf16>
    %3 = arith.extf %2 : vector<1x128xbf16> to vector<1x128xf32>
    %c273 = arith.constant 273 : index
    %c0_2 = arith.constant 0 : index
    %4 = vector.load %arg2[%c273, %c0_2] : memref<288x128xbf16, #tpu.memory_space<vmem>>, vector<1x128xbf16>
    %5 = arith.extf %4 : vector<1x128xbf16> to vector<1x128xf32>
    %c274 = arith.constant 274 : index
    %c0_3 = arith.constant 0 : index
    %6 = vector.load %arg2[%c274, %c0_3] : memref<288x128xbf16, #tpu.memory_space<vmem>>, vector<1x128xbf16>
    %7 = arith.extf %6 : vector<1x128xbf16> to vector<1x128xf32>
    %c0_4 = arith.constant 0 : index
    %c0_5 = arith.constant 0 : index
    %8 = vector.load %arg2[%c0_4, %c0_5] : memref<288x128xbf16, #tpu.memory_space<vmem>>, vector<8x128xbf16>
    %cst = arith.constant dense<0.000000e+00> : vector<128x128xf32>
    %9 = tpu.matmul %1, %8, %cst {dimension_numbers = #tpu.dot_dimension_numbers<[1], [0], [0], [1], [0, 0, 1, 1], [], []>} : vector<128x8xbf16>, vector<8x128xbf16>, vector<128x128xf32> -> vector<128x128xf32>
    %10 = vector.broadcast %3 : vector<1x128xf32> to vector<128x128xf32>
    %11 = arith.addf %9, %10 : vector<128x128xf32>
    %cst_6 = arith.constant 0.000000e+00 : f32
    %12 = vector.broadcast %cst_6 : f32 to vector<128x128xf32>
    %13 = arith.cmpf ogt, %11, %12 : vector<128x128xf32>
    %14 = math.exp %11 : vector<128x128xf32>
    %cst_7 = arith.constant 1.000000e+00 : f32
    %15 = vector.broadcast %cst_7 : f32 to vector<128x128xf32>
    %16 = arith.subf %14, %15 : vector<128x128xf32>
    %17 = arith.select %13, %11, %16 : vector<128x128xi1>, vector<128x128xf32>
    %18 = arith.truncf %17 : vector<128x128xf32> to vector<128x128xbf16>
    %c16 = arith.constant 16 : index
    %c0_8 = arith.constant 0 : index
    %19 = vector.load %arg2[%c16, %c0_8] : memref<288x128xbf16, #tpu.memory_space<vmem>>, vector<128x128xbf16>
    %cst_9 = arith.constant dense<0.000000e+00> : vector<128x128xf32>
    %20 = tpu.matmul %18, %19, %cst_9 {dimension_numbers = #tpu.dot_dimension_numbers<[1], [0], [0], [1], [0, 0, 1, 1], [], []>} : vector<128x128xbf16>, vector<128x128xbf16>, vector<128x128xf32> -> vector<128x128xf32>
    %21 = vector.broadcast %5 : vector<1x128xf32> to vector<128x128xf32>
    %22 = arith.addf %20, %21 : vector<128x128xf32>
    %cst_10 = arith.constant 0.000000e+00 : f32
    %23 = vector.broadcast %cst_10 : f32 to vector<128x128xf32>
    %24 = arith.cmpf ogt, %22, %23 : vector<128x128xf32>
    %25 = math.exp %22 : vector<128x128xf32>
    %cst_11 = arith.constant 1.000000e+00 : f32
    %26 = vector.broadcast %cst_11 : f32 to vector<128x128xf32>
    %27 = arith.subf %25, %26 : vector<128x128xf32>
    %28 = arith.select %24, %22, %27 : vector<128x128xi1>, vector<128x128xf32>
    %29 = arith.truncf %28 : vector<128x128xf32> to vector<128x128xbf16>
    %c144 = arith.constant 144 : index
    %c0_12 = arith.constant 0 : index
    %30 = vector.load %arg2[%c144, %c0_12] : memref<288x128xbf16, #tpu.memory_space<vmem>>, vector<128x128xbf16>
    %cst_13 = arith.constant dense<0.000000e+00> : vector<128x128xf32>
    %31 = tpu.matmul %29, %30, %cst_13 {dimension_numbers = #tpu.dot_dimension_numbers<[1], [0], [0], [1], [0, 0, 1, 1], [], []>} : vector<128x128xbf16>, vector<128x128xbf16>, vector<128x128xf32> -> vector<128x128xf32>
    %32 = vector.broadcast %7 : vector<1x128xf32> to vector<128x128xf32>
    %33 = arith.addf %31, %32 : vector<128x128xf32>
    %34 = vector.extract_strided_slice %33 {offsets = [0, 0], sizes = [128, 4], strides = [1, 1]} : vector<128x128xf32> to vector<128x4xf32>
    %c0_14 = arith.constant 0 : index
    %c0_15 = arith.constant 0 : index
    %35 = vector.load %arg3[%c0_14, %c0_15] : memref<128x4xf32, #tpu.memory_space<vmem>>, vector<128x4xf32>
    tpu.vector_store %arg3[%c0_14, %c0_15], %34 {strides = array<i32>} : memref<128x4xf32, #tpu.memory_space<vmem>>, vector<128x4xf32>,
    return
  }
  func.func @transform_0(%arg0: i32) -> (i32, i32) {
    %c0_i32 = arith.constant 0 : i32
    %c0_i32_0 = arith.constant 0 : i32
    return %arg0, %c0_i32 : i32, i32
  }
  func.func @transform_1(%arg0: i32) -> (i32, i32) {
    %c0_i32 = arith.constant 0 : i32
    %c0_i32_0 = arith.constant 0 : i32
    %c0_i32_1 = arith.constant 0 : i32
    return %c0_i32, %c0_i32_0 : i32, i32
  }
  func.func @transform_2(%arg0: i32) -> (i32, i32) {
    %c0_i32 = arith.constant 0 : i32
    %c0_i32_0 = arith.constant 0 : i32
    return %arg0, %c0_i32 : i32, i32
  }
}

</mosaic_0001>

<llo_original>
// kernel: latent_odefunc.1
$region0: #{latent_odefunc.1}
  #allocation0 [shape = 'u32[]', space=smem, size = 0x4, offset = 0x4, fixed_abs, tag = 'smem constant byte address 0x4 - core index']
  #allocation1 [shape = 'u32[72,128]{1,0:T(1,128)}', space=vmem, size = 0x9000, scoped, tag = 'internal scratch']
  %s0 = inlined_call_operand.vmem [shape: f32[256,8], index: 0, kind: input, shape index: {}]
  %s1 = inlined_call_operand.vmem [shape: bf16[288,128], index: 1, kind: input, shape index: {}]
  %s2 = inlined_call_operand.vmem [shape: f32[256,4], index: 2, kind: output, shape index: {}]
  %s3 = sld [smem:[#allocation0]]
  $region41: #{latent_odefunc.1} parent=0
    _
  %s5 = ssub.s32 1, %s3
  %s6 = scalar_select 0, %s5, %s3
  loop: start=0, step=1, limit=4
  $region2: #{latent_odefunc.1} parent=0 // loop_pre_header
    _
  $region3: #{latent_odefunc.1} parent=0 // loop_header
    %s8 = sphi 0, %s12
    %p9 = scmp.ge.s32.totalorder %s8, 4
    %s18 = sphi 0, %s20
    %s21 = sphi 0, %s18
    %s22 = sphi 0, %s21
    %s38 = sphi 0, %s22
    %s42 = sphi 0, %s42
    %s44 = sphi 0, %s42
    %s45 = sphi 0, %s44
    %s59 = sphi 0, %s45
    %s65 = sphi 0, %s67
    %s68 = sphi 0, %s65
    %s69 = sphi 0, %s68
    %s85 = sphi 0, %s69
  $region4: #{latent_odefunc.1} parent=0 // loop_header_branch
    %11 = sbr.rel (%p9) target = $region8
  $region5: #{latent_odefunc.1} parent=0 // loop_body
    %s13 = ssub.s32 %s8, 1
    %s14 = ssub.s32 %s8, 2
    %s15 = sadd.s32 %s8, 1
    %s16 = ssub.s32 %s8, %s15
    %p17 = scmp.eq.s32.totalorder %s16, 0
    %s19 = sadd.s32 %s18, 1
    %s20 = scalar_select %p17, %s18, %s19
    %p23 = pneg %p17
    %p24 = scmp.eq.s32.totalorder %s8, 1
    %p25 = por %p23, %p24
    %p26 = scmp.ne.s32.totalorder %s18, %s21
    %p27 = scmp.eq.s32.totalorder %s8, 0
    %p28 = por %p26, %p27
    %p29 = scmp.ne.s32.totalorder %s18, %s21
    %p30 = scmp.eq.s32.totalorder %s13, 1
    %p31 = por %p29, %p30
    %p32 = scmp.ne.s32.totalorder %s21, %s22
    %p33 = scmp.eq.s32.totalorder %s13, 0
    %p34 = por %p32, %p33
    %p35 = scmp.ne.s32.totalorder %s21, %s22
    %p36 = scmp.eq.s32.totalorder %s14, 1
    %p37 = por %p35, %p36
    %p39 = scmp.ne.s32.totalorder %s22, %s38
    %p40 = scmp.eq.s32.totalorder %s14, 0
    %p41 = por %p39, %p40
    %s43 = sadd.s32 %s42, 1
    %p46 = scmp.eq.s32.totalorder %s8, 1
    %p47 = scmp.ne.s32.totalorder %s42, %s44
    %p48 = scmp.eq.s32.totalorder %s8, 0
    %p49 = por %p47, %p48
    %p50 = scmp.ne.s32.totalorder %s42, %s44
    %p51 = scmp.eq.s32.totalorder %s13, 1
    %p52 = por %p50, %p51
    %p53 = scmp.ne.s32.totalorder %s44, %s45
    %p54 = scmp.eq.s32.totalorder %s13, 0
    %p55 = por %p53, %p54
    %p56 = scmp.ne.s32.totalorder %s44, %s45
    %p57 = scmp.eq.s32.totalorder %s14, 1
    %p58 = por %p56, %p57
    %p60 = scmp.ne.s32.totalorder %s45, %s59
    %p61 = scmp.eq.s32.totalorder %s14, 0
    %p62 = por %p60, %p61
    %s63 = ssub.s32 %s8, %s15
    %p64 = scmp.eq.s32.totalorder %s63, 0
    %s66 = sadd.s32 %s65, 1
    %s67 = scalar_select %p64, %s65, %s66
    %p70 = pneg %p64
    %p71 = scmp.eq.s32.totalorder %s8, 1
    %p72 = por %p70, %p71
    %p73 = scmp.ne.s32.totalorder %s65, %s68
    %p74 = scmp.eq.s32.totalorder %s8, 0
    %p75 = por %p73, %p74
    %p76 = scmp.ne.s32.totalorder %s65, %s68
    %p77 = scmp.eq.s32.totalorder %s13, 1
    %p78 = por %p76, %p77
    %p79 = scmp.ne.s32.totalorder %s68, %s69
    %p80 = scmp.eq.s32.totalorder %s13, 0
    %p81 = por %p79, %p80
    %p82 = scmp.ne.s32.totalorder %s68, %s69
    %p83 = scmp.eq.s32.totalorder %s14, 1
    %p84 = por %p82, %p83
    %p86 = scmp.ne.s32.totalorder %s69, %s85
    %p87 = scmp.eq.s32.totalorder %s14, 0
    %p88 = por %p86, %p87
    %p89 = scmp.le.s32.totalorder 1, %s8
    %p90 = scmp.lt.s32.totalorder %s8, 3
    %p91 = pnand %p89, %p90
    %p92 = pneg %p91
    // Predicated region
    $region9: #{latent_odefunc.1} parent=5 // pred_check
      _
    $region10: #{latent_odefunc.1} parent=5 // pred_check_branch
      %94 = sbr.rel (%p91) target = $region12
    $region11: #{latent_odefunc.1} parent=5 // pred_region
      %s95 = ssub.s32 %s8, 1
      // Predicated region
      $region13: #{latent_odefunc.1} parent=11 // pred_check
        %p96 = pneg %p55
      $region14: #{latent_odefunc.1} parent=11 // pred_check_branch
        %98 = sbr.rel (%p96) target = $region16
      $region15: #{latent_odefunc.1} parent=11 // pred_region
        _
      $region16: #{latent_odefunc.1} parent=11 // pred_fallthru
        _
    $region12: #{latent_odefunc.1} parent=5 // pred_fallthru
      _
    %p99 = scmp.lt.s32.totalorder %s8, 2
    // Predicated region
    $region17: #{latent_odefunc.1} parent=5 // pred_check
      %p100 = pneg %p99
    $region18: #{latent_odefunc.1} parent=5 // pred_check_branch
      %102 = sbr.rel (%p100) target = $region20
    $region19: #{latent_odefunc.1} parent=5 // pred_region
      // Predicated region
      $region21: #{latent_odefunc.1} parent=19 // pred_check
        %p103 = pneg %p28
      $region22: #{latent_odefunc.1} parent=19 // pred_check_branch
        %105 = sbr.rel (%p103) target = $region24
      $region23: #{latent_odefunc.1} parent=19 // pred_region
        %s106 = smul.u32 16, %s8
        %p107 = scmp.lt.s32.totalorder %s106, 31
        %s108 = scalar_select %p107, %s106, 31
        %s109 = smul.addr %s108, 8
        %s110 = scalar_lea.vmem %s0, %s109
        %s111 = smul.u32 16, %s8
      $region24: #{latent_odefunc.1} parent=19 // pred_fallthru
        _
    $region20: #{latent_odefunc.1} parent=5 // pred_fallthru
      _
    %p112 = scmp.le.s32.totalorder 1, %s8
    %p113 = scmp.lt.s32.totalorder %s8, 3
    %p114 = pnand %p112, %p113
    %p115 = pneg %p114
    // Predicated region
    $region25: #{latent_odefunc.1} parent=5 // pred_check
      _
    $region26: #{latent_odefunc.1} parent=5 // pred_check_branch
      %117 = sbr.rel (%p114) target = $region28
    $region27: #{latent_odefunc.1} parent=5 // pred_region
      %s118 = ssub.s32 %s8, 1
      %s119 = smul.u32 16, %s13
      %p120 = scmp.lt.s32.totalorder %s119, 31
      %s121 = scalar_select %p120, %s119, 31
      %s122 = smul.addr %s121, 8
      %s123 = scalar_lea.vmem %s0, %s122
      %p124 = pneg %p34
      %p125 = pneg %p31
      %p126 = pneg %p55
      %p127 = pneg %p52
      %p128 = pneg %p81
      %p129 = pneg %p78
      %s130 = smul.u32 16, %s13
      %p131 = scmp.lt.s32.totalorder %s130, 31
      %s132 = scalar_select %p131, %s130, 31
      %s133 = smul.addr %s132, 8
      %s134 = scalar_lea.vmem %s2, %s133
      %s135 = smul.u32 16, %s13
      %p136 = scmp.lt.s32.totalorder %s135, 31
      %s137 = scalar_select %p136, %s135, 31
      %s138 = smul.addr %s137, 8
      %s139 = scalar_lea.vmem %s0, %s138
      %s140 = smul.u32 16, %s13
      %s141 = smul.u32 16, %s13
      %p142 = scmp.lt.s32.totalorder %s141, 31
      %s143 = scalar_select %p142, %s141, 31
      %s144 = smul.addr %s143, 8
      %s145 = scalar_lea.vmem %s2, %s144
      %s146 = smul.u32 16, %s13
      %v148 = vld [vmem:[%s139] sm:$0xff]
      %v149 = vld [vmem:[%s139 + $0x8] sm:$0xff]
      %v150 = vld [vmem:[%s139 + $0x10] sm:$0xff]
      %v151 = vld [vmem:[%s139 + $0x18] sm:$0xff]
      %v152 = vld [vmem:[%s139 + $0x20] sm:$0xff]
      %v153 = vld [vmem:[%s139 + $0x28] sm:$0xff]
      %v154 = vld [vmem:[%s139 + $0x30] sm:$0xff]
      %v155 = vld [vmem:[%s139 + $0x38] sm:$0xff]
      %v156 = vld [vmem:[%s139 + $0x40] sm:$0xff]
      %v157 = vld [vmem:[%s139 + $0x48] sm:$0xff]
      %v158 = vld [vmem:[%s139 + $0x50] sm:$0xff]
      %v159 = vld [vmem:[%s139 + $0x58] sm:$0xff]
      %v160 = vld [vmem:[%s139 + $0x60] sm:$0xff]
      %v161 = vld [vmem:[%s139 + $0x68] sm:$0xff]
      %v162 = vld [vmem:[%s139 + $0x70] sm:$0xff]
      %v163 = vld [vmem:[%s139 + $0x78] sm:$0xff]
      %v164 = vpack.c.bf16 %v149, %v148
      %v165 = vpack.c.bf16 %v151, %v150
      %v166 = vpack.c.bf16 %v153, %v152
      %v167 = vpack.c.bf16 %v155, %v154
      %v168 = vpack.c.bf16 %v157, %v156
      %v169 = vpack.c.bf16 %v159, %v158
      %v170 = vpack.c.bf16 %v161, %v160
      %v171 = vpack.c.bf16 %v163, %v162
      %v172 = vld [vmem:[%s1 + $0x88] sm:$0x1]
      %v173 = vunpack.c.l.bf16 %v172
      %v174 = vld [vmem:[%s1 + $0x88] sm:$0x2]
      %v175 = vunpack.c.l.bf16 %v174
      %v176 = vld [vmem:[%s1] sm:$0xf]
      %v177 = vperm.slane %v173, 0
      %vm178 = vcmask 64512
      %v180 = vsel %vm178, %v164, 0
      %v183 = vsel %vm178, %v165, 0
      %v186 = vsel %vm178, %v166, 0
      %v189 = vsel %vm178, %v167, 0
      %v192 = vsel %vm178, %v168, 0
      %v195 = vsel %vm178, %v169, 0
      %v198 = vsel %vm178, %v170, 0
      %v201 = vsel %vm178, %v171, 0
      %vm203 = vcmask 1043456
      %v205 = vsel %vm203, %v176, 0
      %207 = vmatpush.bf16.msra.mxu0 0
      %208 = vmatpush.bf16.msra.mxu0 0
      %209 = vmatpush.bf16.msra.mxu0 0
      %210 = vmatpush.bf16.msra.mxu0 0
      %211 = vmatpush.bf16.msra.mxu0 0
      %212 = vmatpush.bf16.msra.mxu0 0
      %213 = vmatpush.bf16.msra.mxu0 0
      %214 = vmatpush.bf16.msra.mxu0 %v205
      %215 = vmatmul.bf16.gmra.mxu0 %v180
      %v216 = vpop.f32.mrf.mxu0
      %v217 = vadd.f32 %v177, %v216
      %v218 = vpop.f32.mrf.mxu0
      %v219 = vadd.f32 %v177, %v218
      %220 = vmatmul.bf16.gmra.mxu0 %v183
      %v221 = vpop.f32.mrf.mxu0
      %v222 = vadd.f32 %v177, %v221
      %v223 = vpop.f32.mrf.mxu0
      %v224 = vadd.f32 %v177, %v223
      %225 = vmatmul.bf16.gmra.mxu0 %v186
      %v226 = vpop.f32.mrf.mxu0
      %v227 = vadd.f32 %v177, %v226
      %v228 = vpop.f32.mrf.mxu0
      %v229 = vadd.f32 %v177, %v228
      %230 = vmatmul.bf16.gmra.mxu0 %v189
      %v231 = vpop.f32.mrf.mxu0
      %v232 = vadd.f32 %v177, %v231
      %v233 = vpop.f32.mrf.mxu0
      %v234 = vadd.f32 %v177, %v233
      %235 = vmatmul.bf16.gmra.mxu0 %v192
      %v236 = vpop.f32.mrf.mxu0
      %v237 = vadd.f32 %v177, %v236
      %v238 = vpop.f32.mrf.mxu0
      %v239 = vadd.f32 %v177, %v238
      %240 = vmatmul.bf16.gmra.mxu0 %v195
      %v241 = vpop.f32.mrf.mxu0
      %v242 = vadd.f32 %v177, %v241
      %v243 = vpop.f32.mrf.mxu0
      %v244 = vadd.f32 %v177, %v243
      %245 = vmatmul.bf16.gmra.mxu0 %v198
      %v246 = vpop.f32.mrf.mxu0
      %v247 = vadd.f32 %v177, %v246
      %v248 = vpop.f32.mrf.mxu0
      %v249 = vadd.f32 %v177, %v248
      %250 = vmatmul.bf16.gmra.mxu0 %v201
      %v251 = vpop.f32.mrf.mxu0
      %v252 = vadd.f32 %v177, %v251
      %v253 = vpop.f32.mrf.mxu0
      %v254 = vadd.f32 %v177, %v253
      %255 = vdwg.mxu0
      %vm256 = vcmp.gt.f32.partialorder %v217, 0.0
      %vm257 = vcmp.gt.f32.partialorder %v219, 0.0
      %vm258 = vcmp.gt.f32.partialorder %v222, 0.0
      %vm259 = vcmp.gt.f32.partialorder %v224, 0.0
      %vm260 = vcmp.gt.f32.partialorder %v227, 0.0
      %vm261 = vcmp.gt.f32.partialorder %v229, 0.0
      %vm262 = vcmp.gt.f32.partialorder %v232, 0.0
      %vm263 = vcmp.gt.f32.partialorder %v234, 0.0
      %vm264 = vcmp.gt.f32.partialorder %v237, 0.0
      %vm265 = vcmp.gt.f32.partialorder %v239, 0.0
      %vm266 = vcmp.gt.f32.partialorder %v242, 0.0
      %vm267 = vcmp.gt.f32.partialorder %v244, 0.0
      %vm268 = vcmp.gt.f32.partialorder %v247, 0.0
      %vm269 = vcmp.gt.f32.partialorder %v249, 0.0
      %vm270 = vcmp.gt.f32.partialorder %v252, 0.0
      %vm271 = vcmp.gt.f32.partialorder %v254, 0.0
      %v272 = vmul.f32 %v217, 1.442695
      %v273 = vpow.pop %v272
      %v274 = vmul.f32 %v219, 1.442695
      %v275 = vpow.pop %v274
      %v276 = vmul.f32 %v222, 1.442695
      %v277 = vpow.pop %v276
      %v278 = vmul.f32 %v224, 1.442695
      %v279 = vpow.pop %v278
      %v280 = vmul.f32 %v227, 1.442695
      %v281 = vpow.pop %v280
      %v282 = vmul.f32 %v229, 1.442695
      %v283 = vpow.pop %v282
      %v284 = vmul.f32 %v232, 1.442695
      %v285 = vpow.pop %v284
      %v286 = vmul.f32 %v234, 1.442695
      %v287 = vpow.pop %v286
      %v288 = vmul.f32 %v237, 1.442695
      %v289 = vpow.pop %v288
      %v290 = vmul.f32 %v239, 1.442695
      %v291 = vpow.pop %v290
      %v292 = vmul.f32 %v242, 1.442695
      %v293 = vpow.pop %v292
      %v294 = vmul.f32 %v244, 1.442695
      %v295 = vpow.pop %v294
      %v296 = vmul.f32 %v247, 1.442695
      %v297 = vpow.pop %v296
      %v298 = vmul.f32 %v249, 1.442695
      %v299 = vpow.pop %v298
      %v300 = vmul.f32 %v252, 1.442695
      %v301 = vpow.pop %v300
      %v302 = vmul.f32 %v254, 1.442695
      %v303 = vpow.pop %v302
      %v304 = vsub.f32 %v273, 1.0
      %v305 = vsub.f32 %v275, 1.0
      %v306 = vsub.f32 %v277, 1.0
      %v307 = vsub.f32 %v279, 1.0
      %v308 = vsub.f32 %v281, 1.0
      %v309 = vsub.f32 %v283, 1.0
      %v310 = vsub.f32 %v285, 1.0
      %v311 = vsub.f32 %v287, 1.0
      %v312 = vsub.f32 %v289, 1.0
      %v313 = vsub.f32 %v291, 1.0
      %v314 = vsub.f32 %v293, 1.0
      %v315 = vsub.f32 %v295, 1.0
      %v316 = vsub.f32 %v297, 1.0
      %v317 = vsub.f32 %v299, 1.0
      %v318 = vsub.f32 %v301, 1.0
      %v319 = vsub.f32 %v303, 1.0
      %v320 = vsel %vm256, %v217, %v304
      %v321 = vsel %vm257, %v219, %v305
      %v322 = vsel %vm258, %v222, %v306
      %v323 = vsel %vm259, %v224, %v307
      %v324 = vsel %vm260, %v227, %v308
      %v325 = vsel %vm261, %v229, %v309
      %v326 = vsel %vm262, %v232, %v310
      %v327 = vsel %vm263, %v234, %v311
      %v328 = vsel %vm264, %v237, %v312
      %v329 = vsel %vm265, %v239, %v313
      %v330 = vsel %vm266, %v242, %v314
      %v331 = vsel %vm267, %v244, %v315
      %v332 = vsel %vm268, %v247, %v316
      %v333 = vsel %vm269, %v249, %v317
      %v334 = vsel %vm270, %v252, %v318
      %v335 = vsel %vm271, %v254, %v319
      %v336 = vpack.c.bf16 %v321, %v320
      %v337 = vpack.c.bf16 %v323, %v322
      %v338 = vpack.c.bf16 %v325, %v324
      %v339 = vpack.c.bf16 %v327, %v326
      %v340 = vpack.c.bf16 %v329, %v328
      %v341 = vpack.c.bf16 %v331, %v330
      %v342 = vpack.c.bf16 %v333, %v332
      %v343 = vpack.c.bf16 %v335, %v334
      %v344 = vld [vmem:[%s1 + $0x8] sm:$0xf]
      %v345 = vld [vmem:[%s1 + $0xc] sm:$0xf]
      %v346 = vld [vmem:[%s1 + $0x10] sm:$0xf]
      %v347 = vld [vmem:[%s1 + $0x14] sm:$0xf]
      %v348 = vld [vmem:[%s1 + $0x18] sm:$0xf]
      %v349 = vld [vmem:[%s1 + $0x1c] sm:$0xf]
      %v350 = vld [vmem:[%s1 + $0x20] sm:$0xf]
      %v351 = vld [vmem:[%s1 + $0x24] sm:$0xf]
      %v352 = vld [vmem:[%s1 + $0x28] sm:$0xf]
      %v353 = vld [vmem:[%s1 + $0x2c] sm:$0xf]
      %v354 = vld [vmem:[%s1 + $0x30] sm:$0xf]
      %v355 = vld [vmem:[%s1 + $0x34] sm:$0xf]
      %v356 = vld [vmem:[%s1 + $0x38] sm:$0xf]
      %v357 = vld [vmem:[%s1 + $0x3c] sm:$0xf]
      %v358 = vld [vmem:[%s1 + $0x40] sm:$0xf]
      %v359 = vld [vmem:[%s1 + $0x44] sm:$0xf]
      %v360 = vperm.slane %v173, 1
      %v377 = vunpack.c.l.b16 %v344
      %v378 = vunpack.c.l.b16 %v345
      %v379 = vunpack.c.l.b16 %v346
      %v380 = vunpack.c.l.b16 %v347
      %v381 = vunpack.c.l.b16 %v348
      %v382 = vunpack.c.l.b16 %v349
      %v383 = vunpack.c.l.b16 %v350
      %v384 = vunpack.c.l.b16 %v351
      %v385 = vunpack.c.l.b16 %v352
      %v386 = vunpack.c.l.b16 %v353
      %v387 = vunpack.c.l.b16 %v354
      %v388 = vunpack.c.l.b16 %v355
      %v389 = vunpack.c.l.b16 %v356
      %v390 = vunpack.c.l.b16 %v357
      %v391 = vunpack.c.l.b16 %v358
      %v392 = vunpack.c.l.b16 %v359
      %v393 = vpack.c.b16 %v378, %v377
      %v394 = vpack.c.b16 %v380, %v379
      %v395 = vpack.c.b16 %v382, %v381
      %v396 = vpack.c.b16 %v384, %v383
      %v397 = vpack.c.b16 %v386, %v385
      %v398 = vpack.c.b16 %v388, %v387
      %v399 = vpack.c.b16 %v390, %v389
      %v400 = vpack.c.b16 %v392, %v391
      %409 = vmatpush.bf16.msra.mxu0 %v400
      %410 = vmatpush.bf16.msra.mxu0 %v399
      %411 = vmatpush.bf16.msra.mxu0 %v398
      %412 = vmatpush.bf16.msra.mxu0 %v397
      %413 = vmatpush.bf16.msra.mxu0 %v396
      %414 = vmatpush.bf16.msra.mxu0 %v395
      %415 = vmatpush.bf16.msra.mxu0 %v394
      %416 = vmatpush.bf16.msra.mxu0 %v393
      %417 = vmatmul.bf16.gmra.mxu0 %v336
      %v418 = vpop.f32.mrf.mxu0
      %v419 = vadd.f32 %v360, %v418
      %v420 = vpop.f32.mrf.mxu0
      %v421 = vadd.f32 %v360, %v420
      %422 = vmatmul.bf16.gmra.mxu0 %v337
      %v423 = vpop.f32.mrf.mxu0
      %v424 = vadd.f32 %v360, %v423
      %v425 = vpop.f32.mrf.mxu0
      %v426 = vadd.f32 %v360, %v425
      %427 = vmatmul.bf16.gmra.mxu0 %v338
      %v428 = vpop.f32.mrf.mxu0
      %v429 = vadd.f32 %v360, %v428
      %v430 = vpop.f32.mrf.mxu0
      %v431 = vadd.f32 %v360, %v430
      %432 = vmatmul.bf16.gmra.mxu0 %v339
      %v433 = vpop.f32.mrf.mxu0
      %v434 = vadd.f32 %v360, %v433
      %v435 = vpop.f32.mrf.mxu0
      %v436 = vadd.f32 %v360, %v435
      %437 = vmatmul.bf16.gmra.mxu0 %v340
      %v438 = vpop.f32.mrf.mxu0
      %v439 = vadd.f32 %v360, %v438
      %v440 = vpop.f32.mrf.mxu0
      %v441 = vadd.f32 %v360, %v440
      %442 = vmatmul.bf16.gmra.mxu0 %v341
      %v443 = vpop.f32.mrf.mxu0
      %v444 = vadd.f32 %v360, %v443
      %v445 = vpop.f32.mrf.mxu0
      %v446 = vadd.f32 %v360, %v445
      %447 = vmatmul.bf16.gmra.mxu0 %v342
      %v448 = vpop.f32.mrf.mxu0
      %v449 = vadd.f32 %v360, %v448
      %v450 = vpop.f32.mrf.mxu0
      %v451 = vadd.f32 %v360, %v450
      %452 = vmatmul.bf16.gmra.mxu0 %v343
      %v453 = vpop.f32.mrf.mxu0
      %v454 = vadd.f32 %v360, %v453
      %v455 = vpop.f32.mrf.mxu0
      %v456 = vadd.f32 %v360, %v455
      %457 = vdwg.mxu0
      %vm458 = vcmp.gt.f32.partialorder %v419, 0.0
      %vm459 = vcmp.gt.f32.partialorder %v421, 0.0
      %vm460 = vcmp.gt.f32.partialorder %v424, 0.0
      %vm461 = vcmp.gt.f32.partialorder %v426, 0.0
      %vm462 = vcmp.gt.f32.partialorder %v429, 0.0
      %vm463 = vcmp.gt.f32.partialorder %v431, 0.0
      %vm464 = vcmp.gt.f32.partialorder %v434, 0.0
      %vm465 = vcmp.gt.f32.partialorder %v436, 0.0
      %vm466 = vcmp.gt.f32.partialorder %v439, 0.0
      %vm467 = vcmp.gt.f32.partialorder %v441, 0.0
      %vm468 = vcmp.gt.f32.partialorder %v444, 0.0
      %vm469 = vcmp.gt.f32.partialorder %v446, 0.0
      %vm470 = vcmp.gt.f32.partialorder %v449, 0.0
      %vm471 = vcmp.gt.f32.partialorder %v451, 0.0
      %vm472 = vcmp.gt.f32.partialorder %v454, 0.0
      %vm473 = vcmp.gt.f32.partialorder %v456, 0.0
      %v474 = vmul.f32 %v419, 1.442695
      %v475 = vpow.pop %v474
      %v476 = vmul.f32 %v421, 1.442695
      %v477 = vpow.pop %v476
      %v478 = vmul.f32 %v424, 1.442695
      %v479 = vpow.pop %v478
      %v480 = vmul.f32 %v426, 1.442695
      %v481 = vpow.pop %v480
      %v482 = vmul.f32 %v429, 1.442695
      %v483 = vpow.pop %v482
      %v484 = vmul.f32 %v431, 1.442695
      %v485 = vpow.pop %v484
      %v486 = vmul.f32 %v434, 1.442695
      %v487 = vpow.pop %v486
      %v488 = vmul.f32 %v436, 1.442695
      %v489 = vpow.pop %v488
      %v490 = vmul.f32 %v439, 1.442695
      %v491 = vpow.pop %v490
      %v492 = vmul.f32 %v441, 1.442695
      %v493 = vpow.pop %v492
      %v494 = vmul.f32 %v444, 1.442695
      %v495 = vpow.pop %v494
      %v496 = vmul.f32 %v446, 1.442695
      %v497 = vpow.pop %v496
      %v498 = vmul.f32 %v449, 1.442695
      %v499 = vpow.pop %v498
      %v500 = vmul.f32 %v451, 1.442695
      %v501 = vpow.pop %v500
      %v502 = vmul.f32 %v454, 1.442695
      %v503 = vpow.pop %v502
      %v504 = vmul.f32 %v456, 1.442695
      %v505 = vpow.pop %v504
      %v506 = vsub.f32 %v475, 1.0
      %v507 = vsub.f32 %v477, 1.0
      %v508 = vsub.f32 %v479, 1.0
      %v509 = vsub.f32 %v481, 1.0
      %v510 = vsub.f32 %v483, 1.0
      %v511 = vsub.f32 %v485, 1.0
      %v512 = vsub.f32 %v487, 1.0
      %v513 = vsub.f32 %v489, 1.0
      %v514 = vsub.f32 %v491, 1.0
      %v515 = vsub.f32 %v493, 1.0
      %v516 = vsub.f32 %v495, 1.0
      %v517 = vsub.f32 %v497, 1.0
      %v518 = vsub.f32 %v499, 1.0
      %v519 = vsub.f32 %v501, 1.0
      %v520 = vsub.f32 %v503, 1.0
      %v521 = vsub.f32 %v505, 1.0
      %v522 = vsel %vm458, %v419, %v506
      %v523 = vsel %vm459, %v421, %v507
      %v524 = vsel %vm460, %v424, %v508
      %v525 = vsel %vm461, %v426, %v509
      %v526 = vsel %vm462, %v429, %v510
      %v527 = vsel %vm463, %v431, %v511
      %v528 = vsel %vm464, %v434, %v512
      %v529 = vsel %vm465, %v436, %v513
      %v530 = vsel %vm466, %v439, %v514
      %v531 = vsel %vm467, %v441, %v515
      %v532 = vsel %vm468, %v444, %v516
      %v533 = vsel %vm469, %v446, %v517
      %v534 = vsel %vm470, %v449, %v518
      %v535 = vsel %vm471, %v451, %v519
      %v536 = vsel %vm472, %v454, %v520
      %v537 = vsel %vm473, %v456, %v521
      %v538 = vpack.c.bf16 %v523, %v522
      %v539 = vpack.c.bf16 %v525, %v524
      %v540 = vpack.c.bf16 %v527, %v526
      %v541 = vpack.c.bf16 %v529, %v528
      %v542 = vpack.c.bf16 %v531, %v530
      %v543 = vpack.c.bf16 %v533, %v532
      %v544 = vpack.c.bf16 %v535, %v534
      %v545 = vpack.c.bf16 %v537, %v536
      %v546 = vld [vmem:[%s1 + $0x48] sm:$0xf]
      %v547 = vld [vmem:[%s1 + $0x4c] sm:$0xf]
      %v548 = vld [vmem:[%s1 + $0x50] sm:$0xf]
      %v549 = vld [vmem:[%s1 + $0x54] sm:$0xf]
      %v550 = vld [vmem:[%s1 + $0x58] sm:$0xf]
      %v551 = vld [vmem:[%s1 + $0x5c] sm:$0xf]
      %v552 = vld [vmem:[%s1 + $0x60] sm:$0xf]
      %v553 = vld [vmem:[%s1 + $0x64] sm:$0xf]
      %v554 = vld [vmem:[%s1 + $0x68] sm:$0xf]
      %v555 = vld [vmem:[%s1 + $0x6c] sm:$0xf]
      %v556 = vld [vmem:[%s1 + $0x70] sm:$0xf]
      %v557 = vld [vmem:[%s1 + $0x74] sm:$0xf]
      %v558 = vld [vmem:[%s1 + $0x78] sm:$0xf]
      %v559 = vld [vmem:[%s1 + $0x7c] sm:$0xf]
      %v560 = vld [vmem:[%s1 + $0x80] sm:$0xf]
      %v561 = vld [vmem:[%s1 + $0x84] sm:$0xf]
      %v562 = vperm.slane %v175, 2
      %v579 = vunpack.c.l.b16 %v546
      %v580 = vunpack.c.l.b16 %v547
      %v581 = vunpack.c.l.b16 %v548
      %v582 = vunpack.c.l.b16 %v549
      %v583 = vunpack.c.l.b16 %v550
      %v584 = vunpack.c.l.b16 %v551
      %v585 = vunpack.c.l.b16 %v552
      %v586 = vunpack.c.l.b16 %v553
      %v587 = vunpack.c.l.b16 %v554
      %v588 = vunpack.c.l.b16 %v555
      %v589 = vunpack.c.l.b16 %v556
      %v590 = vunpack.c.l.b16 %v557
      %v591 = vunpack.c.l.b16 %v558
      %v592 = vunpack.c.l.b16 %v559
      %v593 = vunpack.c.l.b16 %v560
      %v594 = vunpack.c.l.b16 %v561
      %v595 = vpack.c.b16 %v580, %v579
      %v596 = vpack.c.b16 %v582, %v581
      %v597 = vpack.c.b16 %v584, %v583
      %v598 = vpack.c.b16 %v586, %v585
      %v599 = vpack.c.b16 %v588, %v587
      %v600 = vpack.c.b16 %v590, %v589
      %v601 = vpack.c.b16 %v592, %v591
      %v602 = vpack.c.b16 %v594, %v593
      %611 = vmatpush.bf16.msra.mxu0 %v602
      %612 = vmatpush.bf16.msra.mxu0 %v601
      %613 = vmatpush.bf16.msra.mxu0 %v600
      %614 = vmatpush.bf16.msra.mxu0 %v599
      %615 = vmatpush.bf16.msra.mxu0 %v598
      %616 = vmatpush.bf16.msra.mxu0 %v597
      %617 = vmatpush.bf16.msra.mxu0 %v596
      %618 = vmatpush.bf16.msra.mxu0 %v595
      %619 = vmatmul.bf16.gmra.mxu0 %v538
      %v620 = vpop.f32.mrf.mxu0
      %v621 = vadd.f32 %v562, %v620
      %v622 = vpop.f32.mrf.mxu0
      %v623 = vadd.f32 %v562, %v622
      %624 = vmatmul.bf16.gmra.mxu0 %v539
      %v625 = vpop.f32.mrf.mxu0
      %v626 = vadd.f32 %v562, %v625
      %v627 = vpop.f32.mrf.mxu0
      %v628 = vadd.f32 %v562, %v627
      %629 = vmatmul.bf16.gmra.mxu0 %v540
      %v630 = vpop.f32.mrf.mxu0
      %v631 = vadd.f32 %v562, %v630
      %v632 = vpop.f32.mrf.mxu0
      %v633 = vadd.f32 %v562, %v632
      %634 = vmatmul.bf16.gmra.mxu0 %v541
      %v635 = vpop.f32.mrf.mxu0
      %v636 = vadd.f32 %v562, %v635
      %v637 = vpop.f32.mrf.mxu0
      %v638 = vadd.f32 %v562, %v637
      %639 = vmatmul.bf16.gmra.mxu0 %v542
      %v640 = vpop.f32.mrf.mxu0
      %v641 = vadd.f32 %v562, %v640
      %v642 = vpop.f32.mrf.mxu0
      %v643 = vadd.f32 %v562, %v642
      %644 = vmatmul.bf16.gmra.mxu0 %v543
      %v645 = vpop.f32.mrf.mxu0
      %v646 = vadd.f32 %v562, %v645
      %v647 = vpop.f32.mrf.mxu0
      %v648 = vadd.f32 %v562, %v647
      %649 = vmatmul.bf16.gmra.mxu0 %v544
      %v650 = vpop.f32.mrf.mxu0
      %v651 = vadd.f32 %v562, %v650
      %v652 = vpop.f32.mrf.mxu0
      %v653 = vadd.f32 %v562, %v652
      %654 = vmatmul.bf16.gmra.mxu0 %v545
      %v655 = vpop.f32.mrf.mxu0
      %v656 = vadd.f32 %v562, %v655
      %v657 = vpop.f32.mrf.mxu0
      %v658 = vadd.f32 %v562, %v657
      %659 = vdwg.mxu0
      %vm660 = vcmask 31744
      %661 = vst.msk [vmem:[%s145] sm:$0xff] %vm660, %v621
      %662 = vst.msk [vmem:[%s145 + $0x8] sm:$0xff] %vm660, %v623
      %663 = vst.msk [vmem:[%s145 + $0x10] sm:$0xff] %vm660, %v626
      %664 = vst.msk [vmem:[%s145 + $0x18] sm:$0xff] %vm660, %v628
      %665 = vst.msk [vmem:[%s145 + $0x20] sm:$0xff] %vm660, %v631
      %666 = vst.msk [vmem:[%s145 + $0x28] sm:$0xff] %vm660, %v633
      %667 = vst.msk [vmem:[%s145 + $0x30] sm:$0xff] %vm660, %v636
      %668 = vst.msk [vmem:[%s145 + $0x38] sm:$0xff] %vm660, %v638
      %669 = vst.msk [vmem:[%s145 + $0x40] sm:$0xff] %vm660, %v641
      %670 = vst.msk [vmem:[%s145 + $0x48] sm:$0xff] %vm660, %v643
      %671 = vst.msk [vmem:[%s145 + $0x50] sm:$0xff] %vm660, %v646
      %672 = vst.msk [vmem:[%s145 + $0x58] sm:$0xff] %vm660, %v648
      %673 = vst.msk [vmem:[%s145 + $0x60] sm:$0xff] %vm660, %v651
      %674 = vst.msk [vmem:[%s145 + $0x68] sm:$0xff] %vm660, %v653
      %675 = vst.msk [vmem:[%s145 + $0x70] sm:$0xff] %vm660, %v656
      %676 = vst.msk [vmem:[%s145 + $0x78] sm:$0xff] %vm660, %v658
      %s677 = smul.u32 16, %s13
      %p678 = scmp.lt.s32.totalorder %s677, 31
      %s679 = scalar_select %p678, %s677, 31
      %s680 = smul.addr %s679, 8
      %s681 = scalar_lea.vmem %s2, %s680
      // Predicated region
      $region29: #{latent_odefunc.1} parent=27 // pred_check
        %p682 = pneg %p78
      $region30: #{latent_odefunc.1} parent=27 // pred_check_branch
        %684 = sbr.rel (%p682) target = $region32
      $region31: #{latent_odefunc.1} parent=27 // pred_region
        %s685 = smul.u32 16, %s13
      $region32: #{latent_odefunc.1} parent=27 // pred_fallthru
        _
    $region28: #{latent_odefunc.1} parent=5 // pred_fallthru
      _
    %p686 = scmp.le.s32.totalorder 2, %s8
    // Predicated region
    $region33: #{latent_odefunc.1} parent=5 // pred_check
      %p687 = pneg %p686
    $region34: #{latent_odefunc.1} parent=5 // pred_check_branch
      %689 = sbr.rel (%p687) target = $region36
    $region35: #{latent_odefunc.1} parent=5 // pred_region
      %s690 = ssub.s32 %s8, 2
      // Predicated region
      $region37: #{latent_odefunc.1} parent=35 // pred_check
        %p691 = pneg %p84
      $region38: #{latent_odefunc.1} parent=35 // pred_check_branch
        %693 = sbr.rel (%p691) target = $region40
      $region39: #{latent_odefunc.1} parent=35 // pred_region
        %s694 = smul.u32 16, %s14
        %p695 = scmp.lt.s32.totalorder %s694, 31
        %s696 = scalar_select %p695, %s694, 31
        %s697 = smul.addr %s696, 8
        %s698 = scalar_lea.vmem %s2, %s697
      $region40: #{latent_odefunc.1} parent=35 // pred_fallthru
        _
    $region36: #{latent_odefunc.1} parent=5 // pred_fallthru
      _
  $region6: #{latent_odefunc.1} parent=0 // loop_footer
    %s12 = sadd.s32 1, %s8
  $region7: #{latent_odefunc.1} parent=0 // loop_footer_branch
    %7 = sbr.rel target = $region3
  $region8: #{latent_odefunc.1} parent=0 // loop_exit
    _

</llo_original>
